<compile_context>
chip_gen: v7x
topology: tpu7x:2x2x1
jax: 0.10.0
libtpu: 0.0.40
codegen_flags: <defaults>
</compile_context>

<pallas_src>
import functools

import jax
import jax.numpy as jnp
from jax.experimental import pallas as pl
from jax.experimental.pallas import tpu as pltpu

DROP_P = 0.1  # matches torch.nn.Dropout(0.1) (module is in training mode)


def _attn_dropout_kernel(isf_ref, q_ref, k_ref, v_ref, keep_ref, o_ref):
    q = q_ref[...]          # (B, Sq, D)
    k = k_ref[...]          # (B, Sk, D)
    v = v_ref[...]          # (B, Sk, Dv)

    # Fold the 1/inv_scale_factor into q before the first matmul: scales
    # B*Sq*D elements instead of B*Sq*Sk logits.
    q_scaled = q / isf_ref[0]

    # qk = query @ key^T without materializing a transpose (batched
    # contraction over the feature dim; jnp.dot is not batched and .T on a
    # 3-D array reverses all axes).
    s = jnp.einsum('bqd,bkd->bqk', q_scaled, k,
                   preferred_element_type=jnp.float32)          # (B, Sq, Sk)

    # Numerically-stable softmax along the last axis.
    m = jnp.max(s, axis=-1, keepdims=True)
    e = jnp.exp(s - m)
    denom = jnp.sum(e, axis=-1, keepdims=True)
    sm = e * pl.reciprocal(denom, approx=True)                  # EUP reciprocal

    # Dropout: keep_ref holds the pre-scaled keep mask (0 or 1/(1-p)),
    # generated with jax.random in the wrapper.
    dropped = sm * keep_ref[...]

    # output = dropout(softmax) @ value  (MXU)
    out = jnp.einsum('bqk,bkd->bqd', dropped.astype(v.dtype), v,
                     preferred_element_type=jnp.float32)        # (B, Sq, Dv)
    o_ref[...] = out.astype(o_ref.dtype)


@functools.partial(jax.jit, static_argnames=())
def attn_dropout(query, key, value, inv_scale_factor, keep_mask):
    """query: (B,Sq,D) f32, key: (B,Sk,D) f32, value: (B,Sk,Dv) f32,
    inv_scale_factor: (1,) f32, keep_mask: (B,Sq,Sk) f32 (0 or 1/(1-p))
    -> (B,Sq,Dv) f32."""
    B, Sq, D = query.shape
    _, Sk, _ = key.shape
    _, _, Dv = value.shape

    flops = 2 * B * Sq * Sk * (D + Dv)
    bytes_accessed = 4 * (B * Sq * D + B * Sk * D + B * Sk * Dv
                          + B * Sq * Sk + B * Sq * Dv + 1)
    cost = pl.CostEstimate(flops=flops,
                           transcendentals=B * Sq * Sk,   # exp in softmax
                           bytes_accessed=bytes_accessed)

    return pl.pallas_call(
        _attn_dropout_kernel,
        out_shape=jax.ShapeDtypeStruct((B, Sq, Dv), jnp.float32),
        # No grid: the whole (tiny) problem lives in VMEM for one invocation.
        in_specs=[
            pl.BlockSpec(memory_space=pltpu.MemorySpace.SMEM),   # inv_scale (1,)
            pl.BlockSpec(memory_space=pltpu.MemorySpace.VMEM),   # query
            pl.BlockSpec(memory_space=pltpu.MemorySpace.VMEM),   # key
            pl.BlockSpec(memory_space=pltpu.MemorySpace.VMEM),   # value
            pl.BlockSpec(memory_space=pltpu.MemorySpace.VMEM),   # keep mask
        ],
        out_specs=pl.BlockSpec(memory_space=pltpu.MemorySpace.VMEM),
        cost_estimate=cost,
    )(inv_scale_factor, query, key, value, keep_mask)


if __name__ == "__main__":
    # Small shapes consistent with the module's generic (B, S, D) attention.
    # Dv=128 keeps output stores lane-dense (unmasked vst).
    B, Sq, Sk, D, Dv = 2, 8, 16, 32, 128

    k0 = jax.random.PRNGKey(0)
    kq, kk, kv, ks, kd = jax.random.split(k0, 5)

    query = jax.random.normal(kq, (B, Sq, D), dtype=jnp.float32)
    key = jax.random.normal(kk, (B, Sk, D), dtype=jnp.float32)
    value = jax.random.normal(kv, (B, Sk, Dv), dtype=jnp.float32)
    # inv_scale_factor ~ randn(1) in the reference; use a positive draw to
    # keep the division well-behaved.
    inv_scale_factor = jnp.abs(jax.random.normal(ks, (1,), dtype=jnp.float32)) + 0.5

    # Inverted-dropout keep mask, pre-scaled by 1/(1-p).
    # TODO(synk): RNG stream differs from torch's dropout (statistically
    # equivalent only; bitwise match with PyTorch is not possible).
    keep = jax.random.bernoulli(kd, 1.0 - DROP_P, (B, Sq, Sk))
    keep_mask = keep.astype(jnp.float32) / (1.0 - DROP_P)

    out = attn_dropout(query, key, value, inv_scale_factor, keep_mask)
    jax.block_until_ready(out)

    assert out.shape == (B, Sq, Dv)
    assert out.dtype == jnp.float32
    print("KERNEL_OK")
</pallas_src>

<mosaic_0001>
module attributes {stable_mosaic.version = 11 : i64} {
  func.func @_attn_dropout_kernel(%arg0: memref<1xf32, #tpu.memory_space<smem>>, %arg1: memref<2x8x32xf32, #tpu.memory_space<vmem>>, %arg2: memref<2x16x32xf32, #tpu.memory_space<vmem>>, %arg3: memref<2x16x128xf32, #tpu.memory_space<vmem>>, %arg4: memref<2x8x16xf32, #tpu.memory_space<vmem>>, %arg5: memref<2x8x128xf32, #tpu.memory_space<vmem>>) attributes {dimension_semantics = [], scalar_prefetch = 0 : i64, scratch_operands = 0 : i64, tpu.core_type = #tpu.core_type<tc>} {
    %c0 = arith.constant 0 : index
    %c0_0 = arith.constant 0 : index
    %c0_1 = arith.constant 0 : index
    %0 = vector.load %arg1[%c0, %c0_0, %c0_1] : memref<2x8x32xf32, #tpu.memory_space<vmem>>, vector<2x8x32xf32>
    %c0_2 = arith.constant 0 : index
    %c0_3 = arith.constant 0 : index
    %c0_4 = arith.constant 0 : index
    %1 = vector.load %arg2[%c0_2, %c0_3, %c0_4] : memref<2x16x32xf32, #tpu.memory_space<vmem>>, vector<2x16x32xf32>
    %c0_5 = arith.constant 0 : index
    %c0_6 = arith.constant 0 : index
    %c0_7 = arith.constant 0 : index
    %2 = vector.load %arg3[%c0_5, %c0_6, %c0_7] : memref<2x16x128xf32, #tpu.memory_space<vmem>>, vector<2x16x128xf32>
    %c0_8 = arith.constant 0 : index
    %3 = memref.load %arg0[%c0_8] : memref<1xf32, #tpu.memory_space<smem>>
    %4 = vector.broadcast %3 : f32 to vector<2x8x32xf32>
    %5 = arith.divf %0, %4 : vector<2x8x32xf32>
    "tpu.trace_start"() <{level = 10 : i32, message = "bqd,bkd->bqk"}> : () -> ()
    %cst = arith.constant dense<0.000000e+00> : vector<2x8x16xf32>
    %6 = tpu.matmul %5, %1, %cst {dimension_numbers = #tpu.dot_dimension_numbers<[2], [2], [1], [1], [0, 0, 0, 1, 1, 1], [0], [0]>} : vector<2x8x32xf32>, vector<2x16x32xf32>, vector<2x8x16xf32> -> vector<2x8x16xf32>
    "tpu.trace_stop"() : () -> ()
    %cst_9 = arith.constant dense<0xFF800000> : vector<2x8xf32>
    %7 = vector.multi_reduction <maximumf>, %6, %cst_9 [2] : vector<2x8x16xf32> to vector<2x8xf32>
    %8 = vector.shape_cast %7 : vector<2x8xf32> to vector<2x8x1xf32>
    %9 = vector.broadcast %8 : vector<2x8x1xf32> to vector<2x8x16xf32>
    %10 = arith.subf %6, %9 : vector<2x8x16xf32>
    %11 = math.exp %10 : vector<2x8x16xf32>
    %cst_10 = arith.constant dense<0.000000e+00> : vector<2x8xf32>
    %12 = vector.multi_reduction <add>, %11, %cst_10 [2] : vector<2x8x16xf32> to vector<2x8xf32>
    %13 = vector.shape_cast %12 : vector<2x8xf32> to vector<2x8x1xf32>
    %14 = tpu.reciprocal %13 {approx = true} : vector<2x8x1xf32> -> vector<2x8x1xf32>
    %15 = vector.broadcast %14 : vector<2x8x1xf32> to vector<2x8x16xf32>
    %16 = arith.mulf %11, %15 : vector<2x8x16xf32>
    %c0_11 = arith.constant 0 : index
    %c0_12 = arith.constant 0 : index
    %c0_13 = arith.constant 0 : index
    %17 = vector.load %arg4[%c0_11, %c0_12, %c0_13] : memref<2x8x16xf32, #tpu.memory_space<vmem>>, vector<2x8x16xf32>
    %18 = arith.mulf %16, %17 : vector<2x8x16xf32>
    "tpu.trace_start"() <{level = 10 : i32, message = "bqk,bkd->bqd"}> : () -> ()
    %cst_14 = arith.constant dense<0.000000e+00> : vector<2x8x128xf32>
    %19 = tpu.matmul %18, %2, %cst_14 {dimension_numbers = #tpu.dot_dimension_numbers<[2], [1], [1], [2], [0, 0, 0, 1, 1, 2], [0], [0]>} : vector<2x8x16xf32>, vector<2x16x128xf32>, vector<2x8x128xf32> -> vector<2x8x128xf32>
    "tpu.trace_stop"() : () -> ()
    %c0_15 = arith.constant 0 : index
    %c0_16 = arith.constant 0 : index
    %c0_17 = arith.constant 0 : index
    %20 = vector.load %arg5[%c0_15, %c0_16, %c0_17] : memref<2x8x128xf32, #tpu.memory_space<vmem>>, vector<2x8x128xf32>
    tpu.vector_store %arg5[%c0_15, %c0_16, %c0_17], %19 {strides = array<i32>} : memref<2x8x128xf32, #tpu.memory_space<vmem>>, vector<2x8x128xf32>,
    return
  }
}

</mosaic_0001>

<llo_original>
// kernel: attn_dropout.1
$region0: #{attn_dropout.1}
  #allocation0 [shape = 'u32[]', space=smem, size = 0x4, offset = 0x4, fixed_abs, tag = 'smem constant byte address 0x4 - core index']
  #allocation1 [shape = 'u32[144,128]{1,0:T(1,128)}', space=vmem, size = 0x12000, scoped, tag = 'internal scratch']
  #allocation2 [shape = 'f32[1]{0:T(128)S(6)}', space=smem, size = 0x200, scoped, tag = 'scoped memory for attn_dropout.1']
  %s0 = inlined_call_operand.<no memory space> [shape: f32[1], index: 0, kind: input, shape index: {}]
  %s1 = inlined_call_operand.hbm [shape: f32[2,8,32], index: 1, kind: input, shape index: {}]
  %s2 = inlined_call_operand.hbm [shape: f32[2,16,32], index: 2, kind: input, shape index: {}]
  %s3 = inlined_call_operand.hbm [shape: f32[2,16,128], index: 3, kind: input, shape index: {}]
  %s4 = inlined_call_operand.hbm [shape: f32[2,8,16], index: 4, kind: input, shape index: {}]
  %s5 = inlined_call_operand.hbm [shape: f32[2,8,128], index: 5, kind: output, shape index: {}]
  %s6 = sld [smem:[#allocation0]]
  $region46: #{attn_dropout.1} parent=0
    _
  %s8 = ssub.s32 1, %s6
  %s9 = scalar_select 0, %s8, %s6
  %10 = sst [smem:[#allocation2]] %s0
  $region1: #{attn_dropout.1} parent=0
    #allocation3 [shape = 'u8[8192]{0}', space=vmem, size = 0x2000, scoped, tag = 'input window, operand 1, single buffered']
    #allocation4 [shape = 's32[1]{0}', space=sflag, size = 0x4, scoped, tag = 'scoped memory for attn_dropout.1']
    #allocation5 [shape = 's32[1]{0}', space=sflag, size = 0x4, scoped, tag = 'scoped memory for attn_dropout.1']
    #allocation6 [shape = 'u8[16384]{0}', space=vmem, size = 0x4000, scoped, tag = 'input window, operand 2, single buffered']
    #allocation7 [shape = 's32[1]{0}', space=sflag, size = 0x4, scoped, tag = 'scoped memory for attn_dropout.1']
    #allocation8 [shape = 'u8[16384]{0}', space=vmem, size = 0x4000, scoped, tag = 'input window, operand 3, single buffered']
    #allocation9 [shape = 'u8[8192]{0}', space=vmem, size = 0x2000, scoped, tag = 'input window, operand 4, single buffered']
    #allocation10 [shape = 's32[1]{0}', space=sflag, size = 0x4, scoped, tag = 'scoped memory for attn_dropout.1']
    #allocation11 [shape = 'u8[8192]{0}', space=vmem, size = 0x2000, scoped, tag = 'output window, operand 0, single buffered']
    %11 = vsyncpa [#allocation4], 0
    %12 = vsyncpa [#allocation7], 0
    %13 = vsyncpa [#allocation10], 0
    %14 = vsyncpa [#allocation5], 0
    // Predicated region
    $region2: #{attn_dropout.1} parent=1 // pred_check
      _
    $region3: #{attn_dropout.1} parent=1 // pred_check_branch
      %16 = sbr.rel (0) target = $region5
    $region4: #{attn_dropout.1} parent=1 // pred_region
      _
    $region5: #{attn_dropout.1} parent=1 // pred_fallthru
      _
    // Predicated region
    $region6: #{attn_dropout.1} parent=1 // pred_check
      _
    $region7: #{attn_dropout.1} parent=1 // pred_check_branch
      %18 = sbr.rel (0) target = $region9
    $region8: #{attn_dropout.1} parent=1 // pred_region
      %s20 = ssub.s32 256, 256
      %21 = vsyncadd [#allocation4], %s20
      %s22 = sshll.u32 [#allocation3], 4
      %s23 = int_to_ptr.vmem [resolvable:$true] %s22
      %28 = dma.hbm_to_vmem [thread:$0]  %s1, 256, %s23, [#allocation4], 128, 128, 8
    $region9: #{attn_dropout.1} parent=1 // pred_fallthru
      _
    // Predicated region
    $region10: #{attn_dropout.1} parent=1 // pred_check
      _
    $region11: #{attn_dropout.1} parent=1 // pred_check_branch
      %30 = sbr.rel (0) target = $region13
    $region12: #{attn_dropout.1} parent=1 // pred_region
      %s32 = ssub.s32 512, 512
      %33 = vsyncadd [#allocation7], %s32
      %s34 = sshll.u32 [#allocation6], 4
      %s35 = int_to_ptr.vmem [resolvable:$true] %s34
      %40 = dma.hbm_to_vmem [thread:$0]  %s2, 512, %s35, [#allocation7], 128, 128, 8
    $region13: #{attn_dropout.1} parent=1 // pred_fallthru
      _
    // Predicated region
    $region14: #{attn_dropout.1} parent=1 // pred_check
      _
    $region15: #{attn_dropout.1} parent=1 // pred_check_branch
      %42 = sbr.rel (0) target = $region17
    $region16: #{attn_dropout.1} parent=1 // pred_region
      %s44 = ssub.s32 512, 512
      %45 = vsyncadd [#allocation7], %s44
      %s46 = sshll.u32 [#allocation8], 4
      %s47 = int_to_ptr.vmem [resolvable:$true] %s46
      %52 = dma.hbm_to_vmem [thread:$0]  %s3, 512, %s47, [#allocation7], 128, 128, 8
    $region17: #{attn_dropout.1} parent=1 // pred_fallthru
      _
    // Predicated region
    $region18: #{attn_dropout.1} parent=1 // pred_check
      _
    $region19: #{attn_dropout.1} parent=1 // pred_check_branch
      %54 = sbr.rel (0) target = $region21
    $region20: #{attn_dropout.1} parent=1 // pred_region
      %s56 = ssub.s32 256, 256
      %57 = vsyncadd [#allocation10], %s56
      %s58 = sshll.u32 [#allocation9], 4
      %s59 = int_to_ptr.vmem [resolvable:$true] %s58
      %64 = dma.hbm_to_vmem [thread:$0]  %s4, 256, %s59, [#allocation10], 128, 128, 8
    $region21: #{attn_dropout.1} parent=1 // pred_fallthru
      _
    // Predicated region
    $region22: #{attn_dropout.1} parent=1 // pred_check
      _
    $region23: #{attn_dropout.1} parent=1 // pred_check_branch
      %66 = sbr.rel (0) target = $region25
    $region24: #{attn_dropout.1} parent=1 // pred_region
      %67 = dma.done [#allocation4], 256
    $region25: #{attn_dropout.1} parent=1 // pred_fallthru
      _
    // Predicated region
    $region26: #{attn_dropout.1} parent=1 // pred_check
      _
    $region27: #{attn_dropout.1} parent=1 // pred_check_branch
      %69 = sbr.rel (0) target = $region29
    $region28: #{attn_dropout.1} parent=1 // pred_region
      %70 = dma.done [#allocation7], 512
    $region29: #{attn_dropout.1} parent=1 // pred_fallthru
      _
    // Predicated region
    $region30: #{attn_dropout.1} parent=1 // pred_check
      _
    $region31: #{attn_dropout.1} parent=1 // pred_check_branch
      %72 = sbr.rel (0) target = $region33
    $region32: #{attn_dropout.1} parent=1 // pred_region
      %73 = dma.done [#allocation7], 512
    $region33: #{attn_dropout.1} parent=1 // pred_fallthru
      _
    // Predicated region
    $region34: #{attn_dropout.1} parent=1 // pred_check
      _
    $region35: #{attn_dropout.1} parent=1 // pred_check_branch
      %75 = sbr.rel (0) target = $region37
    $region36: #{attn_dropout.1} parent=1 // pred_region
      %76 = dma.done [#allocation10], 256
    $region37: #{attn_dropout.1} parent=1 // pred_fallthru
      _
    %v77 = vld [vmem:[#allocation3] sm:$0xff]
    %v78 = vld [vmem:[#allocation3 + $0x8] sm:$0xff]
    %v79 = vld [vmem:[#allocation6] sm:$0xff]
    %v80 = vld [vmem:[#allocation6 + $0x8] sm:$0xff]
    %v81 = vld [vmem:[#allocation6 + $0x10] sm:$0xff]
    %v82 = vld [vmem:[#allocation6 + $0x18] sm:$0xff]
    %v83 = vld [vmem:[#allocation8] sm:$0xff]
    %v84 = vld [vmem:[#allocation8 + $0x8] sm:$0xff]
    %v85 = vld [vmem:[#allocation8 + $0x10] sm:$0xff]
    %v86 = vld [vmem:[#allocation8 + $0x18] sm:$0xff]
    %s87 = sld [smem:[#allocation2]]
    %v88 = vstv %s87
    %v89 = vrcp.pop %v88
    %v90 = vmul.f32 %v77, %v89
    %v91 = vmul.f32 %v78, %v89
    %vm92 = vcmask 261120
    %v94 = vsel %vm92, %v90, 0
    %v97 = vsel %vm92, %v79, 0
    %v100 = vsel %vm92, %v80, 0
    %102 = vmatprep.subr.mxu0 0.0
    %103 = vmatpush1.xpose.msra.mxu0 %v97
    %104 = vmatprep.subr.mxu0 0.0
    %105 = vmatpush1.xpose.msra.mxu0 %v100
    %106 = vmatprep.subr.mxu0 0.0
    %107 = vmatpush1.xpose.msra.mxu0 0.0
    %108 = vmatprep.subr.mxu0 0.0
    %109 = vmatpush1.xpose.msra.mxu0 0.0
    %110 = vmatprep.subr.mxu0 0.0
    %111 = vmatpush1.xpose.msra.mxu0 0.0
    %112 = vmatprep.subr.mxu0 0.0
    %113 = vmatpush1.xpose.msra.mxu0 0.0
    %114 = vmatprep.subr.mxu0 0.0
    %115 = vmatpush1.xpose.msra.mxu0 0.0
    %116 = vmatprep.subr.mxu0 0.0
    %117 = vmatpush1.xpose.msra.mxu0 0.0
    %118 = vmatprep.subr.mxu0 0.0
    %119 = vmatpush1.xpose.msra.mxu0 0.0
    %120 = vmatprep.subr.mxu0 0.0
    %121 = vmatpush1.xpose.msra.mxu0 0.0
    %122 = vmatprep.subr.mxu0 0.0
    %123 = vmatpush1.xpose.msra.mxu0 0.0
    %124 = vmatprep.subr.mxu0 0.0
    %125 = vmatpush1.xpose.msra.mxu0 0.0
    %126 = vmatprep.subr.mxu0 0.0
    %127 = vmatpush1.xpose.msra.mxu0 0.0
    %128 = vmatprep.subr.mxu0 0.0
    %129 = vmatpush1.xpose.msra.mxu0 0.0
    %130 = vmatprep.subr.mxu0 0.0
    %131 = vmatpush1.xpose.msra.mxu0 0.0
    %132 = vmatprep.subr.mxu0 0.0
    %133 = vmatpush1.xpose.msra.mxu0 0.0
    %134 = vmatprep.subr.mxu0 0.0
    %135 = vmatpush1.xpose.msra.mxu0 0.0
    %136 = vmatprep.subr.mxu0 0.0
    %137 = vmatpush1.xpose.msra.mxu0 0.0
    %138 = vmatprep.subr.mxu0 0.0
    %139 = vmatpush1.xpose.msra.mxu0 0.0
    %140 = vmatprep.subr.mxu0 0.0
    %141 = vmatpush1.xpose.msra.mxu0 0.0
    %142 = vmatprep.subr.mxu0 0.0
    %143 = vmatpush1.xpose.msra.mxu0 0.0
    %144 = vmatprep.subr.mxu0 0.0
    %145 = vmatpush1.xpose.msra.mxu0 0.0
    %146 = vmatprep.subr.mxu0 0.0
    %147 = vmatpush1.xpose.msra.mxu0 0.0
    %148 = vmatprep.subr.mxu0 0.0
    %149 = vmatpush1.xpose.msra.mxu0 0.0
    %150 = vmatprep.subr.mxu0 0.0
    %151 = vmatpush1.xpose.msra.mxu0 0.0
    %152 = vmatprep.subr.mxu0 0.0
    %153 = vmatpush1.xpose.msra.mxu0 0.0
    %154 = vmatprep.subr.mxu0 0.0
    %155 = vmatpush1.xpose.msra.mxu0 0.0
    %156 = vmatprep.subr.mxu0 0.0
    %157 = vmatpush1.xpose.msra.mxu0 0.0
    %158 = vmatprep.subr.mxu0 0.0
    %159 = vmatpush1.xpose.msra.mxu0 0.0
    %160 = vmatprep.subr.mxu0 0.0
    %161 = vmatpush1.xpose.msra.mxu0 0.0
    %162 = vmatprep.subr.mxu0 0.0
    %163 = vmatpush1.xpose.msra.mxu0 0.0
    %164 = vmatprep.subr.mxu0 0.0
    %165 = vmatpush1.xpose.msra.mxu0 0.0
    %166 = vmatprep.mubr.f32.mxu0 0.0
    %167 = vmatmul.mubr.f32.gmra.mrb[0].mxu0 %v94
    %v168 = vpop.f32.mrb[0].mxu0
    %v169 = vadd.f32 0.0, %v168
    %v170 = vpop.f32.mrb[0].mxu0
    %171 = vdwg.mxu0
    %v173 = vsel %vm92, %v91, 0
    %v176 = vsel %vm92, %v81, 0
    %v179 = vsel %vm92, %v82, 0
    %181 = vmatprep.subr.mxu0 0.0
    %182 = vmatpush1.xpose.msra.mxu0 %v176
    %183 = vmatprep.subr.mxu0 0.0
    %184 = vmatpush1.xpose.msra.mxu0 %v179
    %185 = vmatprep.subr.mxu0 0.0
    %186 = vmatpush1.xpose.msra.mxu0 0.0
    %187 = vmatprep.subr.mxu0 0.0
    %188 = vmatpush1.xpose.msra.mxu0 0.0
    %189 = vmatprep.subr.mxu0 0.0
    %190 = vmatpush1.xpose.msra.mxu0 0.0
    %191 = vmatprep.subr.mxu0 0.0
    %192 = vmatpush1.xpose.msra.mxu0 0.0
    %193 = vmatprep.subr.mxu0 0.0
    %194 = vmatpush1.xpose.msra.mxu0 0.0
    %195 = vmatprep.subr.mxu0 0.0
    %196 = vmatpush1.xpose.msra.mxu0 0.0
    %197 = vmatprep.subr.mxu0 0.0
    %198 = vmatpush1.xpose.msra.mxu0 0.0
    %199 = vmatprep.subr.mxu0 0.0
    %200 = vmatpush1.xpose.msra.mxu0 0.0
    %201 = vmatprep.subr.mxu0 0.0
    %202 = vmatpush1.xpose.msra.mxu0 0.0
    %203 = vmatprep.subr.mxu0 0.0
    %204 = vmatpush1.xpose.msra.mxu0 0.0
    %205 = vmatprep.subr.mxu0 0.0
    %206 = vmatpush1.xpose.msra.mxu0 0.0
    %207 = vmatprep.subr.mxu0 0.0
    %208 = vmatpush1.xpose.msra.mxu0 0.0
    %209 = vmatprep.subr.mxu0 0.0
    %210 = vmatpush1.xpose.msra.mxu0 0.0
    %211 = vmatprep.subr.mxu0 0.0
    %212 = vmatpush1.xpose.msra.mxu0 0.0
    %213 = vmatprep.subr.mxu0 0.0
    %214 = vmatpush1.xpose.msra.mxu0 0.0
    %215 = vmatprep.subr.mxu0 0.0
    %216 = vmatpush1.xpose.msra.mxu0 0.0
    %217 = vmatprep.subr.mxu0 0.0
    %218 = vmatpush1.xpose.msra.mxu0 0.0
    %219 = vmatprep.subr.mxu0 0.0
    %220 = vmatpush1.xpose.msra.mxu0 0.0
    %221 = vmatprep.subr.mxu0 0.0
    %222 = vmatpush1.xpose.msra.mxu0 0.0
    %223 = vmatprep.subr.mxu0 0.0
    %224 = vmatpush1.xpose.msra.mxu0 0.0
    %225 = vmatprep.subr.mxu0 0.0
    %226 = vmatpush1.xpose.msra.mxu0 0.0
    %227 = vmatprep.subr.mxu0 0.0
    %228 = vmatpush1.xpose.msra.mxu0 0.0
    %229 = vmatprep.subr.mxu0 0.0
    %230 = vmatpush1.xpose.msra.mxu0 0.0
    %231 = vmatprep.subr.mxu0 0.0
    %232 = vmatpush1.xpose.msra.mxu0 0.0
    %233 = vmatprep.subr.mxu0 0.0
    %234 = vmatpush1.xpose.msra.mxu0 0.0
    %235 = vmatprep.subr.mxu0 0.0
    %236 = vmatpush1.xpose.msra.mxu0 0.0
    %237 = vmatprep.subr.mxu0 0.0
    %238 = vmatpush1.xpose.msra.mxu0 0.0
    %239 = vmatprep.subr.mxu0 0.0
    %240 = vmatpush1.xpose.msra.mxu0 0.0
    %241 = vmatprep.subr.mxu0 0.0
    %242 = vmatpush1.xpose.msra.mxu0 0.0
    %243 = vmatprep.subr.mxu0 0.0
    %244 = vmatpush1.xpose.msra.mxu0 0.0
    %245 = vmatprep.mubr.f32.mxu0 0.0
    %246 = vmatmul.mubr.f32.gmra.mrb[0].mxu0 %v173
    %v247 = vpop.f32.mrb[0].mxu0
    %v248 = vadd.f32 0.0, %v247
    %v249 = vpop.f32.mrb[0].mxu0
    %250 = vdwg.mxu0
    %vm251 = vcmask 130048
    %v252 = vsel %vm251, %v169, -inf
    %253 = vmax.xlane.f32.xlu0 %v252
    %v254 = vpop.xlane.xlu0 %253
    %v255 = vsel %vm251, %v248, -inf
    %256 = vmax.xlane.f32.xlu0 %v255
    %v257 = vpop.xlane.xlu0 %256
    %v258 = vsub.f32 %v169, %v254
    %v259 = vsub.f32 %v248, %v257
    %v260 = vmul.f32 %v258, 1.442695
    %v261 = vpow.pop %v260
    %v262 = vmul.f32 %v259, 1.442695
    %v263 = vpow.pop %v262
    %v264 = vsel %vm251, %v261, 0.0
    %265 = vadd.xlane.f32.xlu0 %v264
    %v266 = vpop.xlane.xlu0 %265
    %v267 = vsel %vm251, %v263, 0.0
    %268 = vadd.xlane.f32.xlu0 %v267
    %v269 = vpop.xlane.xlu0 %268
    %v270 = vrcp.pop %v266
    %v271 = vrcp.pop %v269
    %v272 = vmul.f32 %v261, %v270
    %v273 = vmul.f32 %v263, %v271
    %v274 = vld [vmem:[#allocation9] sm:$0xff]
    %v275 = vld [vmem:[#allocation9 + $0x8] sm:$0xff]
    %v276 = vmul.f32 %v272, %v274
    %v277 = vmul.f32 %v273, %v275
    %v279 = vsel %vm251, %v276, 0
    %281 = vmatprep.subr.mxu0 0.0
    %282 = vmatpush1.msra.mxu0 %v83
    %283 = vmatprep.subr.mxu0 0.0
    %284 = vmatpush1.msra.mxu0 %v84
    %285 = vmatprep.subr.mxu0 0.0
    %286 = vmatpush1.msra.mxu0 0.0
    %287 = vmatprep.subr.mxu0 0.0
    %288 = vmatpush1.msra.mxu0 0.0
    %289 = vmatprep.subr.mxu0 0.0
    %290 = vmatpush1.msra.mxu0 0.0
    %291 = vmatprep.subr.mxu0 0.0
    %292 = vmatpush1.msra.mxu0 0.0
    %293 = vmatprep.subr.mxu0 0.0
    %294 = vmatpush1.msra.mxu0 0.0
    %295 = vmatprep.subr.mxu0 0.0
    %296 = vmatpush1.msra.mxu0 0.0
    %297 = vmatprep.subr.mxu0 0.0
    %298 = vmatpush1.msra.mxu0 0.0
    %299 = vmatprep.subr.mxu0 0.0
    %300 = vmatpush1.msra.mxu0 0.0
    %301 = vmatprep.subr.mxu0 0.0
    %302 = vmatpush1.msra.mxu0 0.0
    %303 = vmatprep.subr.mxu0 0.0
    %304 = vmatpush1.msra.mxu0 0.0
    %305 = vmatprep.subr.mxu0 0.0
    %306 = vmatpush1.msra.mxu0 0.0
    %307 = vmatprep.subr.mxu0 0.0
    %308 = vmatpush1.msra.mxu0 0.0
    %309 = vmatprep.subr.mxu0 0.0
    %310 = vmatpush1.msra.mxu0 0.0
    %311 = vmatprep.subr.mxu0 0.0
    %312 = vmatpush1.msra.mxu0 0.0
    %313 = vmatprep.subr.mxu0 0.0
    %314 = vmatpush1.msra.mxu0 0.0
    %315 = vmatprep.subr.mxu0 0.0
    %316 = vmatpush1.msra.mxu0 0.0
    %317 = vmatprep.subr.mxu0 0.0
    %318 = vmatpush1.msra.mxu0 0.0
    %319 = vmatprep.subr.mxu0 0.0
    %320 = vmatpush1.msra.mxu0 0.0
    %321 = vmatprep.subr.mxu0 0.0
    %322 = vmatpush1.msra.mxu0 0.0
    %323 = vmatprep.subr.mxu0 0.0
    %324 = vmatpush1.msra.mxu0 0.0
    %325 = vmatprep.subr.mxu0 0.0
    %326 = vmatpush1.msra.mxu0 0.0
    %327 = vmatprep.subr.mxu0 0.0
    %328 = vmatpush1.msra.mxu0 0.0
    %329 = vmatprep.subr.mxu0 0.0
    %330 = vmatpush1.msra.mxu0 0.0
    %331 = vmatprep.subr.mxu0 0.0
    %332 = vmatpush1.msra.mxu0 0.0
    %333 = vmatprep.subr.mxu0 0.0
    %334 = vmatpush1.msra.mxu0 0.0
    %335 = vmatprep.subr.mxu0 0.0
    %336 = vmatpush1.msra.mxu0 0.0
    %337 = vmatprep.subr.mxu0 0.0
    %338 = vmatpush1.msra.mxu0 0.0
    %339 = vmatprep.subr.mxu0 0.0
    %340 = vmatpush1.msra.mxu0 0.0
    %341 = vmatprep.subr.mxu0 0.0
    %342 = vmatpush1.msra.mxu0 0.0
    %343 = vmatprep.subr.mxu0 0.0
    %344 = vmatpush1.msra.mxu0 0.0
    %345 = vmatprep.mubr.f32.mxu0 0.0
    %346 = vmatmul.mubr.f32.gmra.mrb[0].mxu0 %v279
    %v347 = vpop.f32.mrb[0].mxu0
    %v348 = vadd.f32 0.0, %v347
    %v349 = vpop.f32.mrb[0].mxu0
    %350 = vdwg.mxu0
    %v352 = vsel %vm251, %v277, 0
    %354 = vmatprep.subr.mxu0 0.0
    %355 = vmatpush1.msra.mxu0 %v85
    %356 = vmatprep.subr.mxu0 0.0
    %357 = vmatpush1.msra.mxu0 %v86
    %358 = vmatprep.subr.mxu0 0.0
    %359 = vmatpush1.msra.mxu0 0.0
    %360 = vmatprep.subr.mxu0 0.0
    %361 = vmatpush1.msra.mxu0 0.0
    %362 = vmatprep.subr.mxu0 0.0
    %363 = vmatpush1.msra.mxu0 0.0
    %364 = vmatprep.subr.mxu0 0.0
    %365 = vmatpush1.msra.mxu0 0.0
    %366 = vmatprep.subr.mxu0 0.0
    %367 = vmatpush1.msra.mxu0 0.0
    %368 = vmatprep.subr.mxu0 0.0
    %369 = vmatpush1.msra.mxu0 0.0
    %370 = vmatprep.subr.mxu0 0.0
    %371 = vmatpush1.msra.mxu0 0.0
    %372 = vmatprep.subr.mxu0 0.0
    %373 = vmatpush1.msra.mxu0 0.0
    %374 = vmatprep.subr.mxu0 0.0
    %375 = vmatpush1.msra.mxu0 0.0
    %376 = vmatprep.subr.mxu0 0.0
    %377 = vmatpush1.msra.mxu0 0.0
    %378 = vmatprep.subr.mxu0 0.0
    %379 = vmatpush1.msra.mxu0 0.0
    %380 = vmatprep.subr.mxu0 0.0
    %381 = vmatpush1.msra.mxu0 0.0
    %382 = vmatprep.subr.mxu0 0.0
    %383 = vmatpush1.msra.mxu0 0.0
    %384 = vmatprep.subr.mxu0 0.0
    %385 = vmatpush1.msra.mxu0 0.0
    %386 = vmatprep.subr.mxu0 0.0
    %387 = vmatpush1.msra.mxu0 0.0
    %388 = vmatprep.subr.mxu0 0.0
    %389 = vmatpush1.msra.mxu0 0.0
    %390 = vmatprep.subr.mxu0 0.0
    %391 = vmatpush1.msra.mxu0 0.0
    %392 = vmatprep.subr.mxu0 0.0
    %393 = vmatpush1.msra.mxu0 0.0
    %394 = vmatprep.subr.mxu0 0.0
    %395 = vmatpush1.msra.mxu0 0.0
    %396 = vmatprep.subr.mxu0 0.0
    %397 = vmatpush1.msra.mxu0 0.0
    %398 = vmatprep.subr.mxu0 0.0
    %399 = vmatpush1.msra.mxu0 0.0
    %400 = vmatprep.subr.mxu0 0.0
    %401 = vmatpush1.msra.mxu0 0.0
    %402 = vmatprep.subr.mxu0 0.0
    %403 = vmatpush1.msra.mxu0 0.0
    %404 = vmatprep.subr.mxu0 0.0
    %405 = vmatpush1.msra.mxu0 0.0
    %406 = vmatprep.subr.mxu0 0.0
    %407 = vmatpush1.msra.mxu0 0.0
    %408 = vmatprep.subr.mxu0 0.0
    %409 = vmatpush1.msra.mxu0 0.0
    %410 = vmatprep.subr.mxu0 0.0
    %411 = vmatpush1.msra.mxu0 0.0
    %412 = vmatprep.subr.mxu0 0.0
    %413 = vmatpush1.msra.mxu0 0.0
    %414 = vmatprep.subr.mxu0 0.0
    %415 = vmatpush1.msra.mxu0 0.0
    %416 = vmatprep.subr.mxu0 0.0
    %417 = vmatpush1.msra.mxu0 0.0
    %418 = vmatprep.mubr.f32.mxu0 0.0
    %419 = vmatmul.mubr.f32.gmra.mrb[0].mxu0 %v352
    %v420 = vpop.f32.mrb[0].mxu0
    %v421 = vadd.f32 0.0, %v420
    %v422 = vpop.f32.mrb[0].mxu0
    %423 = vdwg.mxu0
    %424 = vst [vmem:[#allocation11] sm:$0xff] %v348
    %425 = vst [vmem:[#allocation11 + $0x8] sm:$0xff] %v421
    // Predicated region
    $region38: #{attn_dropout.1} parent=1 // pred_check
      _
    $region39: #{attn_dropout.1} parent=1 // pred_check_branch
      %427 = sbr.rel (0) target = $region41
    $region40: #{attn_dropout.1} parent=1 // pred_region
      %s429 = ssub.s32 256, 256
      %430 = vsyncadd [#allocation5], %s429
      %s431 = sshll.u32 [#allocation11], 4
      %s432 = int_to_ptr.vmem [resolvable:$true] %s431
      %437 = dma.vmem_to_hbm [thread:$0]  %s432, 256, %s5, [#allocation5], 128, 128, 8
    $region41: #{attn_dropout.1} parent=1 // pred_fallthru
      _
    // Predicated region
    $region42: #{attn_dropout.1} parent=1 // pred_check
      _
    $region43: #{attn_dropout.1} parent=1 // pred_check_branch
      %439 = sbr.rel (0) target = $region45
    $region44: #{attn_dropout.1} parent=1 // pred_region
      %440 = dma.done [#allocation5], 256
    $region45: #{attn_dropout.1} parent=1 // pred_fallthru
      _
    %441 = vsyncpa [#allocation4], 1
    %442 = vsyncpa [#allocation7], 1
    %443 = vsyncpa [#allocation10], 1
    %444 = vsyncpa [#allocation5], 1

</llo_original>
